<compile_context>
chip_gen: v7x
topology: tpu7x:2x2x1
jax: 0.10.0
libtpu: 0.0.40
codegen_flags: <defaults>
</compile_context>

<pallas_src>
import functools

import jax
import jax.numpy as jnp
from jax.experimental import pallas as pl
from jax.experimental.pallas import tpu as pltpu


def _task_decomp_kernel(conv_w_ref, feat_ref, out_ref):
    """out = relu(conv_w @ feat) for one (batch, HW-tile) grid point.

    conv_w_ref : (F, C)    bf16, same block across HW tiles -> resident in VMEM
    feat_ref   : (C, THW)  f32 streamed from HBM, cast to bf16 in-kernel
    out_ref    : (F, THW)
    """
    x = feat_ref[...].astype(jnp.bfloat16)          # free: VPU slack, mem-bound kernel
    acc = jnp.dot(conv_w_ref[...], x, preferred_element_type=jnp.float32)
    out_ref[...] = jnp.maximum(acc, 0.0).astype(out_ref.dtype)   # ReLU activate


def task_decomposition(feat, W1, b1, W2, b2, Wred,
                       avg_feat=None, max_feat=None, *,
                       tile_hw=8192, out_dtype=jnp.float32):
    """feat: (B, C, H, W) f32.  avg_feat/max_feat: optional (B, C) poolings.

    W1,b1,W2,b2: layer-attention 1x1 convs (squeezed to dense).  Wred: (F, C)
    reduction_conv weight (1x1 conv squeezed).  Returns (B, F, H, W) out_dtype.
    """
    B, C, H, W = feat.shape
    HW = H * W
    F_feat = Wred.shape[0]
    S = W2.shape[0]
    assert C == F_feat * S

    # ---- pooling: single pass over feat (avg & max fuse under jit) ----
    if avg_feat is None:
        avg_feat = jnp.mean(feat, axis=(2, 3))                   # adaptive_avg_pool2d
    if max_feat is None:
        max_feat = jnp.max(feat, axis=(2, 3))                    # adaptive_max_pool2d

    # ---- tiny layer-attention path, hoisted to plain JAX (O(B*C) work) ----
    def layer_attention(x):                                      # 1x1 convs on (B,C,1,1) == dense
        h = jnp.maximum(x @ W1.T + b1, 0.0)                      # ReLU
        return h @ W2.T + b2

    w = jax.nn.sigmoid(layer_attention(avg_feat) + layer_attention(max_feat))  # (B, S)
    # conv_w[b, f, s*F + g] = w[b, s] * Wred[f, s*F + g]   (PyTorch reshape trick)
    conv_w = (w[:, None, :, None] *
              Wred.reshape(1, F_feat, S, F_feat)).reshape(B, F_feat, C)
    conv_w = conv_w.astype(jnp.bfloat16)             # cast fuses with the product above

    # ---- lane-dense HW: pad to a multiple of 128 (sliced back after) ----
    hw_pad = pl.cdiv(HW, 128) * 128
    feat3 = feat.reshape(B, C, HW)                   # feat stays f32: no extra HBM copy
    if hw_pad != HW:
        feat3 = jnp.pad(feat3, ((0, 0), (0, 0), (0, hw_pad - HW)))

    # ---- tile size: 128-aligned, as large as budget allows ----
    thw = max(128, (min(int(tile_hw), hw_pad) // 128) * 128)
    n_hw = pl.cdiv(hw_pad, thw)

    out_itemsize = jnp.dtype(out_dtype).itemsize
    # double-buffered feat (f32) + out blocks, plus resident conv_w (bf16)
    vmem_need = 2 * (C * thw * 4 + F_feat * thw * out_itemsize) + 2 * (F_feat * C * 2)
    vmem_limit = int(min(max(2 * vmem_need, 16 << 20), 48 << 20))

    grid_spec = pltpu.PrefetchScalarGridSpec(
        num_scalar_prefetch=0,
        grid=(B, n_hw),
        in_specs=[
            # conv_w: same block across HW tiles -> stays resident per batch
            pl.BlockSpec((pl.Squeezed(), F_feat, C), lambda b, t: (b, 0, 0)),
            # feat tile: the dominant HBM stream, double-buffered by BlockSpec
            pl.BlockSpec((pl.Squeezed(), C, thw), lambda b, t: (b, 0, t)),
        ],
        out_specs=pl.BlockSpec((pl.Squeezed(), F_feat, thw), lambda b, t: (b, 0, t)),
    )

    cost = pl.CostEstimate(
        flops=2 * B * F_feat * C * hw_pad,
        transcendentals=0,
        bytes_accessed=B * C * hw_pad * 4 + B * F_feat * C * 2
                       + B * F_feat * hw_pad * out_itemsize,
    )

    out = pl.pallas_call(
        _task_decomp_kernel,
        out_shape=jax.ShapeDtypeStruct((B, F_feat, hw_pad), out_dtype),
        grid_spec=grid_spec,
        compiler_params=pltpu.CompilerParams(
            dimension_semantics=("parallel", "parallel"),
            vmem_limit_bytes=vmem_limit),
        cost_estimate=cost,
    )(conv_w, feat3)

    if hw_pad != HW:
        out = out[:, :, :HW]
    return out.reshape(B, F_feat, H, W)


def reference(feat, W1, b1, W2, b2, Wred):
    """Pure-JAX f32 mirror of the PyTorch forward (for verification)."""
    B, C, H, W = feat.shape
    F_feat = Wred.shape[0]
    S = W2.shape[0]
    avg = feat.mean(axis=(2, 3))
    mx = feat.max(axis=(2, 3))

    def la(x):
        h = jnp.maximum(x @ W1.T + b1, 0.0)
        return h @ W2.T + b2

    w = jax.nn.sigmoid(la(avg) + la(mx))                                # (B, S)
    conv_w = (w[:, None, :, None] *
              Wred.reshape(1, F_feat, S, F_feat)).reshape(B, F_feat, C)
    featf = feat.reshape(B, C, H * W)
    out = jnp.einsum('bfc,bcp->bfp', conv_w, featf)
    return jnp.maximum(out, 0.0).reshape(B, F_feat, H, W)


if __name__ == "__main__":
    # Module config: feat_channels=32, stacked_convs=4, la_down_rate=8
    B, F_FEAT, S, H, W = 2, 32, 4, 16, 16
    C = F_FEAT * S                 # in_channels = 128
    HID = C // 8                   # layer-attention hidden = 16

    key = jax.random.PRNGKey(0)
    k_feat, k_w1, k_w2, k_wred = jax.random.split(key, 4)

    feat = jax.random.normal(k_feat, (B, C, H, W), dtype=jnp.float32)

    # Deterministic parameter init mirroring init_weights (normal std 0.001/0.01, bias 0).
    W1 = 0.001 * jax.random.normal(k_w1, (HID, C), dtype=jnp.float32)
    b1 = jnp.zeros((HID,), dtype=jnp.float32)
    W2 = 0.001 * jax.random.normal(k_w2, (S, HID), dtype=jnp.float32)
    b2 = jnp.zeros((S,), dtype=jnp.float32)
    Wred = 0.01 * jax.random.normal(k_wred, (F_FEAT, C), dtype=jnp.float32)  # (F,C,1,1) squeezed

    ref = reference(feat, W1, b1, W2, b2, Wred)

    # Default large tile (single HW tile per batch at this size).
    fwd_big = jax.jit(functools.partial(task_decomposition, tile_hw=8192))
    out_big = jax.block_until_ready(fwd_big(feat, W1, b1, W2, b2, Wred))

    # Small tile to exercise multi-tile grid + double buffering (2 batches x 2 HW tiles).
    fwd_small = jax.jit(functools.partial(task_decomposition, tile_hw=128))
    out_small = jax.block_until_ready(fwd_small(feat, W1, b1, W2, b2, Wred))

    assert out_big.shape == (B, F_FEAT, H, W)
    assert out_small.shape == (B, F_FEAT, H, W)
    # bf16 MXU streams with f32 accumulation -> slightly relaxed tolerance.
    assert jnp.allclose(out_big, ref, rtol=2e-2, atol=2e-3)
    assert jnp.allclose(out_small, ref, rtol=2e-2, atol=2e-3)

    print("KERNEL_OK")
</pallas_src>

<mosaic_0001>
module attributes {stable_mosaic.version = 11 : i64} {
  func.func @_task_decomp_kernel(%arg0: i32, %arg1: i32, %arg2: memref<1x32x128xbf16, #tpu.memory_space<vmem>>, %arg3: memref<1x128x256xf32, #tpu.memory_space<vmem>>, %arg4: memref<1x32x256xf32, #tpu.memory_space<vmem>>) attributes {dimension_semantics = [#tpu.dimension_semantics<parallel>, #tpu.dimension_semantics<parallel>], iteration_bounds = array<i64: 2, 1>, scalar_prefetch = 0 : i64, scratch_operands = 0 : i64, tpu.core_type = #tpu.core_type<tc>, window_params = [{transform_indices = @transform_0, window_bounds = array<i64: 1, 32, 128>}, {transform_indices = @transform_1, window_bounds = array<i64: 1, 128, 256>}, {transform_indices = @transform_2, window_bounds = array<i64: 1, 32, 256>}]} {
    %c0 = arith.constant 0 : index
    %c0_0 = arith.constant 0 : index
    %c0_1 = arith.constant 0 : index
    %0 = vector.load %arg3[%c0, %c0_0, %c0_1] : memref<1x128x256xf32, #tpu.memory_space<vmem>>, vector<1x128x256xf32>
    %1 = vector.shape_cast %0 : vector<1x128x256xf32> to vector<128x256xf32>
    %2 = arith.truncf %1 : vector<128x256xf32> to vector<128x256xbf16>
    %c0_2 = arith.constant 0 : index
    %c0_3 = arith.constant 0 : index
    %c0_4 = arith.constant 0 : index
    %3 = vector.load %arg2[%c0_2, %c0_3, %c0_4] : memref<1x32x128xbf16, #tpu.memory_space<vmem>>, vector<1x32x128xbf16>
    %4 = vector.shape_cast %3 : vector<1x32x128xbf16> to vector<32x128xbf16>
    %cst = arith.constant dense<0.000000e+00> : vector<32x256xf32>
    %5 = tpu.matmul %4, %2, %cst {dimension_numbers = #tpu.dot_dimension_numbers<[1], [0], [0], [1], [0, 0, 1, 1], [], []>} : vector<32x128xbf16>, vector<128x256xbf16>, vector<32x256xf32> -> vector<32x256xf32>
    %cst_5 = arith.constant 0.000000e+00 : f32
    %6 = vector.broadcast %cst_5 : f32 to vector<32x256xf32>
    %7 = arith.maximumf %5, %6 : vector<32x256xf32>
    %c0_6 = arith.constant 0 : index
    %c0_7 = arith.constant 0 : index
    %c0_8 = arith.constant 0 : index
    %8 = vector.load %arg4[%c0_6, %c0_7, %c0_8] : memref<1x32x256xf32, #tpu.memory_space<vmem>>, vector<1x32x256xf32>
    %9 = vector.shape_cast %8 : vector<1x32x256xf32> to vector<32x256xf32>
    %10 = vector.shape_cast %7 : vector<32x256xf32> to vector<1x32x256xf32>
    tpu.vector_store %arg4[%c0_6, %c0_7, %c0_8], %10 {strides = array<i32>} : memref<1x32x256xf32, #tpu.memory_space<vmem>>, vector<1x32x256xf32>,
    return
  }
  func.func @transform_0(%arg0: i32, %arg1: i32) -> (i32, i32, i32) {
    %c0_i32 = arith.constant 0 : i32
    %c0_i32_0 = arith.constant 0 : i32
    %c0_i32_1 = arith.constant 0 : i32
    return %arg0, %c0_i32, %c0_i32_0 : i32, i32, i32
  }
  func.func @transform_1(%arg0: i32, %arg1: i32) -> (i32, i32, i32) {
    %c0_i32 = arith.constant 0 : i32
    %c0_i32_0 = arith.constant 0 : i32
    return %arg0, %c0_i32, %arg1 : i32, i32, i32
  }
  func.func @transform_2(%arg0: i32, %arg1: i32) -> (i32, i32, i32) {
    %c0_i32 = arith.constant 0 : i32
    %c0_i32_0 = arith.constant 0 : i32
    return %arg0, %c0_i32, %arg1 : i32, i32, i32
  }
}

</mosaic_0001>

<llo_original>
// kernel: task_decomposition.1
$region0: #{task_decomposition.1}
  #allocation0 [shape = 'u32[]', space=smem, size = 0x4, offset = 0x4, fixed_abs, tag = 'smem constant byte address 0x4 - core index']
  #allocation1 [shape = 'u32[144,128]{1,0:T(1,128)}', space=vmem, size = 0x12000, scoped, tag = 'internal scratch']
  %s0 = inlined_call_operand.vmem [shape: bf16[2,32,128], index: 0, kind: input, shape index: {}]
  %s1 = inlined_call_operand.vmem [shape: f32[2,128,256], index: 1, kind: input, shape index: {}]
  %s2 = inlined_call_operand.vmem [shape: f32[2,32,256], index: 2, kind: output, shape index: {}]
  %s3 = sld [smem:[#allocation0]]
  $region41: #{task_decomposition.1} parent=0
    _
  %s5 = ssub.s32 1, %s3
  %s6 = scalar_select 0, %s5, %s3
  loop: start=0, step=1, limit=4
  $region2: #{task_decomposition.1} parent=0 // loop_pre_header
    _
  $region3: #{task_decomposition.1} parent=0 // loop_header
    %s8 = sphi 0, %s12
    %p9 = scmp.ge.s32.totalorder %s8, 4
    %s15 = sphi 0, %s27
    %s16 = sphi 0, %s23
    %s17 = sphi 0, %s15
    %s18 = sphi 0, %s16
    %s19 = sphi 0, %s17
    %s20 = sphi 0, %s18
    %s30 = sphi 0, %s32
    %s33 = sphi 0, %s30
    %s34 = sphi 0, %s33
    %s50 = sphi 0, %s34
    %s58 = sphi 0, %s60
    %s61 = sphi 0, %s58
    %s62 = sphi 0, %s61
    %s78 = sphi 0, %s62
    %s86 = sphi 0, %s88
    %s89 = sphi 0, %s86
    %s90 = sphi 0, %s89
    %s106 = sphi 0, %s90
  $region4: #{task_decomposition.1} parent=0 // loop_header_branch
    %11 = sbr.rel (%p9) target = $region8
  $region5: #{task_decomposition.1} parent=0 // loop_body
    %s13 = ssub.s32 %s8, 1
    %s14 = ssub.s32 %s8, 2
    %s21 = sadd.s32 1, %s16
    %p22 = scmp.ge.s32.totalorder %s21, 1
    %s23 = scalar_select %p22, 0, %s21
    %s24 = sadd.s32 1, %s15
    %s25 = scalar_select %p22, %s24, %s15
    %p26 = scmp.ge.s32.totalorder %s25, 2
    %s27 = scalar_select %p26, 0, %s25
    %s28 = ssub.s32 %s15, %s27
    %p29 = scmp.eq.s32.totalorder %s28, 0
    %s31 = sadd.s32 %s30, 1
    %s32 = scalar_select %p29, %s30, %s31
    %p35 = pneg %p29
    %p36 = scmp.eq.s32.totalorder %s8, 1
    %p37 = por %p35, %p36
    %p38 = scmp.ne.s32.totalorder %s30, %s33
    %p39 = scmp.eq.s32.totalorder %s8, 0
    %p40 = por %p38, %p39
    %p41 = scmp.ne.s32.totalorder %s30, %s33
    %p42 = scmp.eq.s32.totalorder %s13, 1
    %p43 = por %p41, %p42
    %p44 = scmp.ne.s32.totalorder %s33, %s34
    %p45 = scmp.eq.s32.totalorder %s13, 0
    %p46 = por %p44, %p45
    %p47 = scmp.ne.s32.totalorder %s33, %s34
    %p48 = scmp.eq.s32.totalorder %s14, 1
    %p49 = por %p47, %p48
    %p51 = scmp.ne.s32.totalorder %s34, %s50
    %p52 = scmp.eq.s32.totalorder %s14, 0
    %p53 = por %p51, %p52
    %s54 = ssub.s32 %s15, %s27
    %s55 = ssub.s32 %s16, %s23
    %s56 = sor.u32 %s54, %s55
    %p57 = scmp.eq.s32.totalorder %s56, 0
    %s59 = sadd.s32 %s58, 1
    %s60 = scalar_select %p57, %s58, %s59
    %p63 = pneg %p57
    %p64 = scmp.eq.s32.totalorder %s8, 1
    %p65 = por %p63, %p64
    %p66 = scmp.ne.s32.totalorder %s58, %s61
    %p67 = scmp.eq.s32.totalorder %s8, 0
    %p68 = por %p66, %p67
    %p69 = scmp.ne.s32.totalorder %s58, %s61
    %p70 = scmp.eq.s32.totalorder %s13, 1
    %p71 = por %p69, %p70
    %p72 = scmp.ne.s32.totalorder %s61, %s62
    %p73 = scmp.eq.s32.totalorder %s13, 0
    %p74 = por %p72, %p73
    %p75 = scmp.ne.s32.totalorder %s61, %s62
    %p76 = scmp.eq.s32.totalorder %s14, 1
    %p77 = por %p75, %p76
    %p79 = scmp.ne.s32.totalorder %s62, %s78
    %p80 = scmp.eq.s32.totalorder %s14, 0
    %p81 = por %p79, %p80
    %s82 = ssub.s32 %s15, %s27
    %s83 = ssub.s32 %s16, %s23
    %s84 = sor.u32 %s82, %s83
    %p85 = scmp.eq.s32.totalorder %s84, 0
    %s87 = sadd.s32 %s86, 1
    %s88 = scalar_select %p85, %s86, %s87
    %p91 = pneg %p85
    %p92 = scmp.eq.s32.totalorder %s8, 1
    %p93 = por %p91, %p92
    %p94 = scmp.ne.s32.totalorder %s86, %s89
    %p95 = scmp.eq.s32.totalorder %s8, 0
    %p96 = por %p94, %p95
    %p97 = scmp.ne.s32.totalorder %s86, %s89
    %p98 = scmp.eq.s32.totalorder %s13, 1
    %p99 = por %p97, %p98
    %p100 = scmp.ne.s32.totalorder %s89, %s90
    %p101 = scmp.eq.s32.totalorder %s13, 0
    %p102 = por %p100, %p101
    %p103 = scmp.ne.s32.totalorder %s89, %s90
    %p104 = scmp.eq.s32.totalorder %s14, 1
    %p105 = por %p103, %p104
    %p107 = scmp.ne.s32.totalorder %s90, %s106
    %p108 = scmp.eq.s32.totalorder %s14, 0
    %p109 = por %p107, %p108
    %p110 = scmp.le.s32.totalorder 1, %s8
    %p111 = scmp.lt.s32.totalorder %s8, 3
    %p112 = pnand %p110, %p111
    %p113 = pneg %p112
    // Predicated region
    $region9: #{task_decomposition.1} parent=5 // pred_check
      _
    $region10: #{task_decomposition.1} parent=5 // pred_check_branch
      %115 = sbr.rel (%p112) target = $region12
    $region11: #{task_decomposition.1} parent=5 // pred_region
      %s116 = ssub.s32 %s8, 1
    $region12: #{task_decomposition.1} parent=5 // pred_fallthru
      _
    %p117 = scmp.lt.s32.totalorder %s8, 2
    // Predicated region
    $region13: #{task_decomposition.1} parent=5 // pred_check
      %p118 = pneg %p117
    $region14: #{task_decomposition.1} parent=5 // pred_check_branch
      %120 = sbr.rel (%p118) target = $region16
    $region15: #{task_decomposition.1} parent=5 // pred_region
      // Predicated region
      $region17: #{task_decomposition.1} parent=15 // pred_check
        %p121 = pneg %p40
      $region18: #{task_decomposition.1} parent=15 // pred_check_branch
        %123 = sbr.rel (%p121) target = $region20
      $region19: #{task_decomposition.1} parent=15 // pred_region
        %p124 = scmp.lt.s32.totalorder %s15, 1
        %s125 = scalar_select %p124, %s15, 1
        %s126 = smul.addr %s125, 4
        %s127 = smul.addr %s126, 4
        %s128 = scalar_lea.vmem %s0, %s127
      $region20: #{task_decomposition.1} parent=15 // pred_fallthru
        _
      // Predicated region
      $region21: #{task_decomposition.1} parent=15 // pred_check
        %p129 = pneg %p68
      $region22: #{task_decomposition.1} parent=15 // pred_check_branch
        %131 = sbr.rel (%p129) target = $region24
      $region23: #{task_decomposition.1} parent=15 // pred_region
        %s132 = smul.u32 2, %s16
        %p133 = scmp.lt.s32.totalorder %s15, 1
        %s134 = scalar_select %p133, %s15, 1
        %p135 = scmp.lt.s32.totalorder %s132, 1
        %s136 = scalar_select %p135, %s132, 1
        %s137 = smul.addr %s134, 32
        %s138 = sadd.s32 %s136, %s137
        %s139 = smul.addr %s138, 8
        %s140 = scalar_lea.vmem %s1, %s139
        %s141 = smul.u32 2, %s16
      $region24: #{task_decomposition.1} parent=15 // pred_fallthru
        _
    $region16: #{task_decomposition.1} parent=5 // pred_fallthru
      _
    %p142 = scmp.le.s32.totalorder 1, %s8
    %p143 = scmp.lt.s32.totalorder %s8, 3
    %p144 = pnand %p142, %p143
    %p145 = pneg %p144
    // Predicated region
    $region25: #{task_decomposition.1} parent=5 // pred_check
      _
    $region26: #{task_decomposition.1} parent=5 // pred_check_branch
      %147 = sbr.rel (%p144) target = $region28
    $region27: #{task_decomposition.1} parent=5 // pred_region
      %s148 = ssub.s32 %s8, 1
      %p149 = scmp.lt.s32.totalorder %s17, 1
      %s150 = scalar_select %p149, %s17, 1
      %s151 = smul.addr %s150, 4
      %s152 = smul.addr %s151, 4
      %s153 = scalar_lea.vmem %s0, %s152
      %p154 = pneg %p46
      %p155 = pneg %p43
      %s156 = smul.u32 2, %s18
      %p157 = scmp.lt.s32.totalorder %s17, 1
      %s158 = scalar_select %p157, %s17, 1
      %p159 = scmp.lt.s32.totalorder %s156, 1
      %s160 = scalar_select %p159, %s156, 1
      %s161 = smul.addr %s158, 32
      %s162 = sadd.s32 %s160, %s161
      %s163 = smul.addr %s162, 8
      %s164 = scalar_lea.vmem %s1, %s163
      %p165 = pneg %p74
      %p166 = pneg %p71
      %p167 = pneg %p102
      %p168 = pneg %p99
      %s169 = smul.u32 2, %s18
      %p170 = scmp.lt.s32.totalorder %s17, 1
      %s171 = scalar_select %p170, %s17, 1
      %p172 = scmp.lt.s32.totalorder %s169, 1
      %s173 = scalar_select %p172, %s169, 1
      %s174 = smul.addr %s171, 8
      %s175 = sadd.s32 %s173, %s174
      %s176 = smul.addr %s175, 8
      %s177 = scalar_lea.vmem %s2, %s176
      %p178 = scmp.lt.s32.totalorder %s17, 1
      %s179 = scalar_select %p178, %s17, 1
      %s180 = smul.addr %s179, 4
      %s181 = smul.addr %s180, 4
      %s182 = scalar_lea.vmem %s0, %s181
      %s183 = smul.u32 2, %s18
      %p184 = scmp.lt.s32.totalorder %s17, 1
      %s185 = scalar_select %p184, %s17, 1
      %p186 = scmp.lt.s32.totalorder %s183, 1
      %s187 = scalar_select %p186, %s183, 1
      %s188 = smul.addr %s185, 32
      %s189 = sadd.s32 %s187, %s188
      %s190 = smul.addr %s189, 8
      %s191 = scalar_lea.vmem %s1, %s190
      %s192 = smul.u32 2, %s18
      %s193 = smul.u32 2, %s18
      %p194 = scmp.lt.s32.totalorder %s17, 1
      %s195 = scalar_select %p194, %s17, 1
      %p196 = scmp.lt.s32.totalorder %s193, 1
      %s197 = scalar_select %p196, %s193, 1
      %s198 = smul.addr %s195, 8
      %s199 = sadd.s32 %s197, %s198
      %s200 = smul.addr %s199, 8
      %s201 = scalar_lea.vmem %s2, %s200
      %s202 = smul.u32 2, %s18
      %v204 = vld [vmem:[%s191] sm:$0xff]
      %v205 = vld [vmem:[%s191 + $0x8] sm:$0xff]
      %v206 = vld [vmem:[%s191 + $0x10] sm:$0xff]
      %v207 = vld [vmem:[%s191 + $0x18] sm:$0xff]
      %v208 = vld [vmem:[%s191 + $0x20] sm:$0xff]
      %v209 = vld [vmem:[%s191 + $0x28] sm:$0xff]
      %v210 = vld [vmem:[%s191 + $0x30] sm:$0xff]
      %v211 = vld [vmem:[%s191 + $0x38] sm:$0xff]
      %v212 = vld [vmem:[%s191 + $0x40] sm:$0xff]
      %v213 = vld [vmem:[%s191 + $0x48] sm:$0xff]
      %v214 = vld [vmem:[%s191 + $0x50] sm:$0xff]
      %v215 = vld [vmem:[%s191 + $0x58] sm:$0xff]
      %v216 = vld [vmem:[%s191 + $0x60] sm:$0xff]
      %v217 = vld [vmem:[%s191 + $0x68] sm:$0xff]
      %v218 = vld [vmem:[%s191 + $0x70] sm:$0xff]
      %v219 = vld [vmem:[%s191 + $0x78] sm:$0xff]
      %v220 = vld [vmem:[%s191 + $0x80] sm:$0xff]
      %v221 = vld [vmem:[%s191 + $0x88] sm:$0xff]
      %v222 = vld [vmem:[%s191 + $0x90] sm:$0xff]
      %v223 = vld [vmem:[%s191 + $0x98] sm:$0xff]
      %v224 = vld [vmem:[%s191 + $0xa0] sm:$0xff]
      %v225 = vld [vmem:[%s191 + $0xa8] sm:$0xff]
      %v226 = vld [vmem:[%s191 + $0xb0] sm:$0xff]
      %v227 = vld [vmem:[%s191 + $0xb8] sm:$0xff]
      %v228 = vld [vmem:[%s191 + $0xc0] sm:$0xff]
      %v229 = vld [vmem:[%s191 + $0xc8] sm:$0xff]
      %v230 = vld [vmem:[%s191 + $0xd0] sm:$0xff]
      %v231 = vld [vmem:[%s191 + $0xd8] sm:$0xff]
      %v232 = vld [vmem:[%s191 + $0xe0] sm:$0xff]
      %v233 = vld [vmem:[%s191 + $0xe8] sm:$0xff]
      %v234 = vld [vmem:[%s191 + $0xf0] sm:$0xff]
      %v235 = vld [vmem:[%s191 + $0xf8] sm:$0xff]
      %v236 = vpack.c.bf16 %v206, %v204
      %v237 = vpack.c.bf16 %v207, %v205
      %v238 = vpack.c.bf16 %v210, %v208
      %v239 = vpack.c.bf16 %v211, %v209
      %v240 = vpack.c.bf16 %v214, %v212
      %v241 = vpack.c.bf16 %v215, %v213
      %v242 = vpack.c.bf16 %v218, %v216
      %v243 = vpack.c.bf16 %v219, %v217
      %v244 = vpack.c.bf16 %v222, %v220
      %v245 = vpack.c.bf16 %v223, %v221
      %v246 = vpack.c.bf16 %v226, %v224
      %v247 = vpack.c.bf16 %v227, %v225
      %v248 = vpack.c.bf16 %v230, %v228
      %v249 = vpack.c.bf16 %v231, %v229
      %v250 = vpack.c.bf16 %v234, %v232
      %v251 = vpack.c.bf16 %v235, %v233
      %v252 = vld [vmem:[%s182] sm:$0xf]
      %v253 = vld [vmem:[%s182 + $0x4] sm:$0xf]
      %v254 = vld [vmem:[%s182 + $0x8] sm:$0xf]
      %v255 = vld [vmem:[%s182 + $0xc] sm:$0xf]
      %v260 = vunpack.c.l.b16 %v252
      %v261 = vunpack.c.l.b16 %v253
      %v262 = vunpack.c.l.b16 %v254
      %v263 = vunpack.c.l.b16 %v255
      %v264 = vpack.c.b16 %v261, %v260
      %v265 = vpack.c.b16 %v263, %v262
      %268 = vmatprep.subr.bf16.mxu0 %v237
      %269 = vmatpush1.bf16.msra.mxu0 %v236
      %270 = vmatprep.subr.bf16.mxu0 %v239
      %271 = vmatpush1.bf16.msra.mxu0 %v238
      %272 = vmatprep.subr.bf16.mxu0 %v241
      %273 = vmatpush1.bf16.msra.mxu0 %v240
      %274 = vmatprep.subr.bf16.mxu0 %v243
      %275 = vmatpush1.bf16.msra.mxu0 %v242
      %276 = vmatprep.subr.bf16.mxu0 %v245
      %277 = vmatpush1.bf16.msra.mxu0 %v244
      %278 = vmatprep.subr.bf16.mxu0 %v247
      %279 = vmatpush1.bf16.msra.mxu0 %v246
      %280 = vmatprep.subr.bf16.mxu0 %v249
      %281 = vmatpush1.bf16.msra.mxu0 %v248
      %282 = vmatprep.subr.bf16.mxu0 %v251
      %283 = vmatpush1.bf16.msra.mxu0 %v250
      %284 = vmatprep.subr.bf16.mxu0 0
      %285 = vmatpush1.bf16.msra.mxu0 0
      %286 = vmatprep.subr.bf16.mxu0 0
      %287 = vmatpush1.bf16.msra.mxu0 0
      %288 = vmatprep.subr.bf16.mxu0 0
      %289 = vmatpush1.bf16.msra.mxu0 0
      %290 = vmatprep.subr.bf16.mxu0 0
      %291 = vmatpush1.bf16.msra.mxu0 0
      %292 = vmatprep.subr.bf16.mxu0 0
      %293 = vmatpush1.bf16.msra.mxu0 0
      %294 = vmatprep.subr.bf16.mxu0 0
      %295 = vmatpush1.bf16.msra.mxu0 0
      %296 = vmatprep.subr.bf16.mxu0 0
      %297 = vmatpush1.bf16.msra.mxu0 0
      %298 = vmatprep.subr.bf16.mxu0 0
      %299 = vmatpush1.bf16.msra.mxu0 0
      %300 = vmatprep.mubr.bf16.mxu0 0
      %301 = vmatmul.mubr.bf16.gmra.mrb[0].mxu0 %v264
      %v302 = vpop.f32.mrb[0].mxu0
      %v303 = vadd.f32 0.0, %v302
      %v304 = vpop.f32.mrb[0].mxu0
      %v305 = vadd.f32 0.0, %v304
      %v306 = vpop.f32.mrb[0].mxu0
      %v307 = vadd.f32 0.0, %v306
      %v308 = vpop.f32.mrb[0].mxu0
      %v309 = vadd.f32 0.0, %v308
      %310 = vmatprep.mubr.bf16.mxu0 0
      %311 = vmatmul.mubr.bf16.gmra.mrb[0].mxu0 %v265
      %v312 = vpop.f32.mrb[0].mxu0
      %v313 = vadd.f32 0.0, %v312
      %v314 = vpop.f32.mrb[0].mxu0
      %v315 = vadd.f32 0.0, %v314
      %v316 = vpop.f32.mrb[0].mxu0
      %v317 = vadd.f32 0.0, %v316
      %v318 = vpop.f32.mrb[0].mxu0
      %v319 = vadd.f32 0.0, %v318
      %320 = vdwg.mxu0
      %v321 = vmax.f32 %v303, 0.0
      %v322 = vmax.f32 %v305, 0.0
      %v323 = vmax.f32 %v307, 0.0
      %v324 = vmax.f32 %v309, 0.0
      %v325 = vmax.f32 %v313, 0.0
      %v326 = vmax.f32 %v315, 0.0
      %v327 = vmax.f32 %v317, 0.0
      %v328 = vmax.f32 %v319, 0.0
      %329 = vst [vmem:[%s201] sm:$0xff] %v321
      %330 = vst [vmem:[%s201 + $0x8] sm:$0xff] %v322
      %331 = vst [vmem:[%s201 + $0x10] sm:$0xff] %v323
      %332 = vst [vmem:[%s201 + $0x18] sm:$0xff] %v324
      %333 = vst [vmem:[%s201 + $0x20] sm:$0xff] %v325
      %334 = vst [vmem:[%s201 + $0x28] sm:$0xff] %v326
      %335 = vst [vmem:[%s201 + $0x30] sm:$0xff] %v327
      %336 = vst [vmem:[%s201 + $0x38] sm:$0xff] %v328
      %s337 = smul.u32 2, %s18
      %p338 = scmp.lt.s32.totalorder %s17, 1
      %s339 = scalar_select %p338, %s17, 1
      %p340 = scmp.lt.s32.totalorder %s337, 1
      %s341 = scalar_select %p340, %s337, 1
      %s342 = smul.addr %s339, 8
      %s343 = sadd.s32 %s341, %s342
      %s344 = smul.addr %s343, 8
      %s345 = scalar_lea.vmem %s2, %s344
      // Predicated region
      $region29: #{task_decomposition.1} parent=27 // pred_check
        %p346 = pneg %p99
      $region30: #{task_decomposition.1} parent=27 // pred_check_branch
        %348 = sbr.rel (%p346) target = $region32
      $region31: #{task_decomposition.1} parent=27 // pred_region
        %s349 = smul.u32 2, %s18
      $region32: #{task_decomposition.1} parent=27 // pred_fallthru
        _
    $region28: #{task_decomposition.1} parent=5 // pred_fallthru
      _
    %p350 = scmp.le.s32.totalorder 2, %s8
    // Predicated region
    $region33: #{task_decomposition.1} parent=5 // pred_check
      %p351 = pneg %p350
    $region34: #{task_decomposition.1} parent=5 // pred_check_branch
      %353 = sbr.rel (%p351) target = $region36
    $region35: #{task_decomposition.1} parent=5 // pred_region
      %s354 = ssub.s32 %s8, 2
      // Predicated region
      $region37: #{task_decomposition.1} parent=35 // pred_check
        %p355 = pneg %p105
      $region38: #{task_decomposition.1} parent=35 // pred_check_branch
        %357 = sbr.rel (%p355) target = $region40
      $region39: #{task_decomposition.1} parent=35 // pred_region
        %s358 = smul.u32 2, %s20
        %p359 = scmp.lt.s32.totalorder %s19, 1
        %s360 = scalar_select %p359, %s19, 1
        %p361 = scmp.lt.s32.totalorder %s358, 1
        %s362 = scalar_select %p361, %s358, 1
        %s363 = smul.addr %s360, 8
        %s364 = sadd.s32 %s362, %s363
        %s365 = smul.addr %s364, 8
        %s366 = scalar_lea.vmem %s2, %s365
      $region40: #{task_decomposition.1} parent=35 // pred_fallthru
        _
    $region36: #{task_decomposition.1} parent=5 // pred_fallthru
      _
  $region6: #{task_decomposition.1} parent=0 // loop_footer
    %s12 = sadd.s32 1, %s8
  $region7: #{task_decomposition.1} parent=0 // loop_footer_branch
    %7 = sbr.rel target = $region3
  $region8: #{task_decomposition.1} parent=0 // loop_exit
    _

</llo_original>
